<compile_context>
chip_gen: v7x
topology: tpu7x:2x2x1
jax: 0.10.0
libtpu: 0.0.40
codegen_flags: <defaults>
</compile_context>

<pallas_src>
import functools

import jax
import jax.numpy as jnp
from jax.experimental import pallas as pl
from jax.experimental.pallas import tpu as pltpu

_LANE = 128
_MIB = 1 << 20


def _isru_kernel(x_ref, o_ref, *, alpha):
    # y = x * rsqrt(1 + alpha * x^2); rsqrt lowers to the EUP slot (separate
    # bundle slot), so the kernel stays purely HBM-bandwidth bound.
    x = x_ref[...].astype(jnp.float32)
    o_ref[...] = (x * jax.lax.rsqrt(1.0 + alpha * (x * x))).astype(o_ref.dtype)


def _isru_plain(x, alpha):
    # Fused plain-JAX fallback (single HBM read + write, any shape).
    xf = x.astype(jnp.float32)
    return (xf * jax.lax.rsqrt(1.0 + alpha * (xf * xf))).astype(x.dtype)


def _sublane_quantum(dtype):
    # f32 -> 8, bf16/f16 -> 16, int8/fp8 -> 32 (sub-32-bit packs along sublanes).
    return max(8, 32 // jnp.dtype(dtype).itemsize)


def _choose_slab(n):
    """Lane-dense 2D slab (rows, width) covering exactly n elements (no pad).

    Only n % width == 0 is required: the (8,128) constraint applies to the
    block shape, and the pl.cdiv grid clips the ragged last row-block."""
    for w in (2048, 1024, 512, 256, _LANE):
        if n % w == 0:
            return n // w, w
    return None


def _select_tiling():
    """Return (block_bytes, vmem_limit_bytes) sized for this chip generation."""
    try:
        vmem_phys = int(pltpu.get_tpu_info().vmem_capacity_bytes)
    except Exception:
        # Interpret mode / API drift: assume the smallest generation (v7x per-TC).
        vmem_phys = 64 * _MIB
    # in + out, double-buffered => 4x block live at once; keep >= 1 block of
    # headroom for compiler scratch and stay well inside physical VMEM.
    block_bytes = max(2 * _MIB, min(8 * _MIB, vmem_phys // 8))
    vmem_limit = min(vmem_phys - 4 * _MIB, 5 * block_bytes + 2 * _MIB)
    vmem_limit = max(vmem_limit, 4 * block_bytes + _MIB)
    return block_bytes, vmem_limit


def isru(x, alpha=1.0, *, target_block_bytes=None, donate_input=False):
    """Elementwise ISRU: x / sqrt(1 + alpha * x^2). x: any shape, float dtype.

    alpha must be a concrete Python/NumPy scalar (fixed hyperparameter, baked
    in at trace time). Set donate_input=True only if the caller no longer
    needs x (output then aliases the input HBM buffer).
    """
    alpha = float(alpha)
    orig_shape = x.shape
    dtype = x.dtype
    itemsize = jnp.dtype(dtype).itemsize
    sub_q = _sublane_quantum(dtype)

    flat = x.reshape(-1)          # metadata-only reshape, no HBM pass
    n = flat.shape[0]
    if n == 0:
        return x

    slab = _choose_slab(n)
    if slab is None:
        # Pathological element count (n % 128 != 0): a fused XLA elementwise
        # op (1 HBM pass) beats any pad -> kernel -> slice scheme (3 passes).
        return _isru_plain(x, alpha)

    rows, width = slab
    x2d = flat.reshape(rows, width)   # metadata-only reshape

    block_bytes, vmem_limit = _select_tiling()
    if target_block_bytes is not None:
        block_bytes = int(target_block_bytes)

    # Block rows: multiple of the sublane quantum (or the whole array), sized
    # to ~block_bytes so each grid step moves a large, lane-dense tile.
    rt = block_bytes // (width * itemsize)
    rt = max(sub_q, (rt // sub_q) * sub_q)
    rt = min(rt, rows)   # rt == rows (< sub_q) is legal: block == full array

    grid = (pl.cdiv(rows, rt),)   # ragged last block is clipped by Pallas

    cost = pl.CostEstimate(
        flops=3 * n,
        transcendentals=n,
        bytes_accessed=2 * n * itemsize,
    )

    out2d = pl.pallas_call(
        functools.partial(_isru_kernel, alpha=alpha),
        out_shape=jax.ShapeDtypeStruct((rows, width), dtype),
        grid_spec=pltpu.PrefetchScalarGridSpec(
            num_scalar_prefetch=0,
            grid=grid,
            in_specs=[pl.BlockSpec((rt, width), lambda i: (i, 0))],
            out_specs=pl.BlockSpec((rt, width), lambda i: (i, 0)),
        ),
        compiler_params=pltpu.CompilerParams(
            # "parallel" allows the 1-D grid to shard across v7x's two
            # TensorCores (two DMA queues) and is a measured no-op on
            # single-TC v5e/v6e.
            dimension_semantics=("parallel",),
            vmem_limit_bytes=vmem_limit,
        ),
        cost_estimate=cost,
        input_output_aliases=({0: 0} if donate_input else {}),
    )(x2d)

    return out2d.reshape(orig_shape)


if __name__ == "__main__":
    key = jax.random.PRNGKey(0)
    # NCHW-style input, consistent with typical conv-model use of ISRU.
    x = jax.random.normal(key, (2, 4, 16, 16), dtype=jnp.float32)
    alpha = 1.0  # module default

    y = isru(x, alpha)
    jax.block_until_ready(y)

    # Plain-JAX mirror of the PyTorch forward: x / sqrt(1 + alpha * x^2).
    y_ref = x / jnp.sqrt(1.0 + alpha * x * x)
    assert y.shape == x.shape and y.dtype == x.dtype
    assert jnp.max(jnp.abs(y - y_ref)) < 1e-5

    # Also exercise a shape that is NOT a multiple of 128 (plain-JAX fallback)
    # and a bf16 input, to cover the non-default paths.
    x_odd = jax.random.normal(jax.random.PRNGKey(1), (3, 5, 7), dtype=jnp.float32)
    y_odd = isru(x_odd, alpha)
    assert jnp.max(jnp.abs(y_odd - x_odd / jnp.sqrt(1.0 + alpha * x_odd * x_odd))) < 1e-5

    x_bf16 = x.astype(jnp.bfloat16)
    y_bf16 = isru(x_bf16, alpha)
    jax.block_until_ready(y_bf16)
    assert y_bf16.dtype == jnp.bfloat16 and y_bf16.shape == x.shape

    print("KERNEL_OK")
</pallas_src>

<mosaic_0001>
module attributes {stable_mosaic.version = 11 : i64} {
  func.func @_isru_kernel(%arg0: i32, %arg1: memref<1x2048xf32, #tpu.memory_space<vmem>>, %arg2: memref<1x2048xf32, #tpu.memory_space<vmem>>) attributes {dimension_semantics = [#tpu.dimension_semantics<parallel>], iteration_bounds = array<i64: 1>, scalar_prefetch = 0 : i64, scratch_operands = 0 : i64, tpu.core_type = #tpu.core_type<tc>, window_params = [{transform_indices = @transform_0, window_bounds = array<i64: 1, 2048>}, {transform_indices = @transform_1, window_bounds = array<i64: 1, 2048>}]} {
    %c0 = arith.constant 0 : index
    %c0_0 = arith.constant 0 : index
    %0 = vector.load %arg1[%c0, %c0_0] : memref<1x2048xf32, #tpu.memory_space<vmem>>, vector<1x2048xf32>
    %1 = arith.mulf %0, %0 : vector<1x2048xf32>
    %cst = arith.constant 1.000000e+00 : f32
    %2 = vector.broadcast %cst : f32 to vector<1x2048xf32>
    %3 = arith.mulf %2, %1 : vector<1x2048xf32>
    %cst_1 = arith.constant 1.000000e+00 : f32
    %4 = vector.broadcast %cst_1 : f32 to vector<1x2048xf32>
    %5 = arith.addf %4, %3 : vector<1x2048xf32>
    %6 = math.rsqrt %5 : vector<1x2048xf32>
    %7 = arith.mulf %0, %6 : vector<1x2048xf32>
    %c0_2 = arith.constant 0 : index
    %c0_3 = arith.constant 0 : index
    %8 = vector.load %arg2[%c0_2, %c0_3] : memref<1x2048xf32, #tpu.memory_space<vmem>>, vector<1x2048xf32>
    tpu.vector_store %arg2[%c0_2, %c0_3], %7 {strides = array<i32>} : memref<1x2048xf32, #tpu.memory_space<vmem>>, vector<1x2048xf32>,
    return
  }
  func.func @transform_0(%arg0: i32) -> (i32, i32) {
    %c0_i32 = arith.constant 0 : i32
    %c0_i32_0 = arith.constant 0 : i32
    return %arg0, %c0_i32 : i32, i32
  }
  func.func @transform_1(%arg0: i32) -> (i32, i32) {
    %c0_i32 = arith.constant 0 : i32
    %c0_i32_0 = arith.constant 0 : i32
    return %arg0, %c0_i32 : i32, i32
  }
}

</mosaic_0001>

<llo_original>
// kernel: tpu_custom_call.1
$region0: #{tpu_custom_call.1}
  #allocation0 [shape = 'u32[]', space=smem, size = 0x4, offset = 0x4, fixed_abs, tag = 'smem constant byte address 0x4 - core index']
  #allocation1 [shape = 'u32[144,128]{1,0:T(1,128)}', space=vmem, size = 0x12000, scoped, tag = 'internal scratch']
  %s0 = inlined_call_operand.hbm [shape: f32[1,2048], index: 0, kind: input, shape index: {}]
  %s1 = inlined_call_operand.hbm [shape: f32[1,2048], index: 1, kind: output, shape index: {}]
  %s2 = sld [smem:[#allocation0]]
  $region18: #{tpu_custom_call.1} parent=0
    _
  %s4 = ssub.s32 1, %s2
  %s5 = scalar_select 0, %s4, %s2
  $region1: #{tpu_custom_call.1} parent=0
    #allocation2 [shape = 'u8[8192]{0}', space=vmem, size = 0x2000, scoped, tag = 'input window, operand 0, single buffered']
    #allocation3 [shape = 's32[1]{0}', space=sflag, size = 0x4, scoped, tag = 'scoped memory for tpu_custom_call.1']
    #allocation4 [shape = 's32[1]{0}', space=sflag, size = 0x4, scoped, tag = 'scoped memory for tpu_custom_call.1']
    #allocation5 [shape = 'u8[8192]{0}', space=vmem, size = 0x2000, scoped, tag = 'output window, operand 0, single buffered']
    %6 = vsyncpa [#allocation3], 0
    %7 = vsyncpa [#allocation4], 0
    // Predicated region
    $region2: #{tpu_custom_call.1} parent=1 // pred_check
      _
    $region3: #{tpu_custom_call.1} parent=1 // pred_check_branch
      %9 = sbr.rel (0) target = $region5
    $region4: #{tpu_custom_call.1} parent=1 // pred_region
      %s11 = ssub.s32 256, 256
      %12 = vsyncadd [#allocation3], %s11
      %s14 = sshll.u32 [#allocation2], 4
      %s15 = int_to_ptr.vmem [resolvable:$true] %s14
      %17 = dma.hbm_to_vmem [thread:$0]  %s0, 256, %s15, [#allocation3]
    $region5: #{tpu_custom_call.1} parent=1 // pred_fallthru
      _
    // Predicated region
    $region6: #{tpu_custom_call.1} parent=1 // pred_check
      _
    $region7: #{tpu_custom_call.1} parent=1 // pred_check_branch
      %19 = sbr.rel (0) target = $region9
    $region8: #{tpu_custom_call.1} parent=1 // pred_region
      %20 = dma.done [#allocation3], 256
    $region9: #{tpu_custom_call.1} parent=1 // pred_fallthru
      _
    %v21 = vld [vmem:[#allocation2] sm:$0xff]
    %v22 = vld [vmem:[#allocation2 + $0x8] sm:$0xff]
    %v23 = vmul.f32 %v21, %v21
    %v24 = vmul.f32 %v22, %v22
    %v25 = vadd.f32 %v23, 1.0
    %v26 = vadd.f32 %v24, 1.0
    %v27 = vrsqrt.pop %v25
    %v28 = vrsqrt.pop %v26
    %v29 = vmul.f32 %v21, %v27
    %v30 = vmul.f32 %v22, %v28
    %31 = vst [vmem:[#allocation5] sm:$0xff] %v29
    %32 = vst [vmem:[#allocation5 + $0x8] sm:$0xff] %v30
    // Predicated region
    $region10: #{tpu_custom_call.1} parent=1 // pred_check
      _
    $region11: #{tpu_custom_call.1} parent=1 // pred_check_branch
      %34 = sbr.rel (0) target = $region13
    $region12: #{tpu_custom_call.1} parent=1 // pred_region
      %s36 = ssub.s32 256, 256
      %37 = vsyncadd [#allocation4], %s36
      %s39 = sshll.u32 [#allocation5], 4
      %s40 = int_to_ptr.vmem [resolvable:$true] %s39
      %42 = dma.vmem_to_hbm [thread:$0]  %s40, 256, %s1, [#allocation4]
    $region13: #{tpu_custom_call.1} parent=1 // pred_fallthru
      _
    // Predicated region
    $region14: #{tpu_custom_call.1} parent=1 // pred_check
      _
    $region15: #{tpu_custom_call.1} parent=1 // pred_check_branch
      %44 = sbr.rel (0) target = $region17
    $region16: #{tpu_custom_call.1} parent=1 // pred_region
      %45 = dma.done [#allocation4], 256
    $region17: #{tpu_custom_call.1} parent=1 // pred_fallthru
      _
    %46 = vsyncpa [#allocation3], 1
    %47 = vsyncpa [#allocation4], 1

</llo_original>
